<compile_context>
chip_gen: v6e
topology: v6e:2x2x1
jax: 0.10.0
libtpu: 0.0.40
codegen_flags: <defaults>
</compile_context>

<pallas_src>
import functools

import jax
import jax.numpy as jnp
from jax import lax
from jax.experimental import pallas as pl
from jax.experimental.pallas import tpu as pltpu

NUM_TIMESTEPS = 1000  # LatentDiffusion default


# --------------------------------------------------------------------------
# Fused kernel: scale + L2-normalize(channels) + q_sample + per-lane MSE partial
# --------------------------------------------------------------------------
def _fused_forward_kernel(x_ref, noise_ref, a_ref, b_ref,
                          xnoisy_ref, lpart_ref, *, scale, do_norm, eps):
    """Block layout (channels on sublanes, spatial tokens on lanes):
         x_ref, noise_ref, xnoisy_ref : (rows, C, HW)   HW = lane axis (multiple of 128)
         a_ref, b_ref                 : (rows, 1, 1)    per-frame DDPM coefficients
         lpart_ref                    : (1, 1, HW)      per-block per-lane loss partial
    """
    x = x_ref[...].astype(jnp.float32)
    if scale is not None:                       # PyTorch: `if self.scale_factor:`
        x = x * scale
    if do_norm:
        # F.normalize(zs, dim=-1) in token layout 'b t (h w) c'  ==  normalize over
        # the channel axis here (axis=-2): a 4-element sublane reduce.
        ss = jnp.sum(x * x, axis=-2, keepdims=True)            # (rows, 1, HW)
        # 1/max(||x||, eps) == rsqrt(max(ss, eps^2)); rsqrt uses the (idle) EUP slot.
        x = x * lax.rsqrt(jnp.maximum(ss, eps * eps))

    noise = noise_ref[...].astype(jnp.float32)
    a = a_ref[...]                                             # (rows, 1, 1)
    b = b_ref[...]
    xnoisy_ref[...] = (a * x + b * noise).astype(xnoisy_ref.dtype)

    # TODO(synk): external UNet eps-prediction unavailable (eps_pred == 0), so the
    # MSE contribution is sum(noise^2).  Keep a per-lane partial (no cross-lane XLU
    # reduce, no serialized accumulator) and finish the reduction in the wrapper.
    sq = noise * noise
    lpart_ref[...] = jnp.sum(sq, axis=(0, 1)).reshape(1, 1, sq.shape[-1])


def _largest_divisor_leq(n, cap):
    cap = int(max(1, min(n, cap)))
    for d in range(cap, 0, -1):
        if n % d == 0:
            return d
    return 1


def fused_preprocess_qsample_loss(frames_bt, noise_bt, a_bt, b_bt, *,
                                  scale_factor, norm_preprocess,
                                  max_block_bytes=2 * 1024 * 1024):
    """frames_bt, noise_bt: (BT, C, HW) float32 (free view of (B,T,C,H,W)).
    a_bt, b_bt: (BT, 1, 1) float32 per-frame q_sample coefficients.
    Returns (x_noisy (BT, C, HW), scalar mean-MSE loss)."""
    bt, c, hw = frames_bt.shape
    frame_bytes = c * hw * frames_bt.dtype.itemsize
    # As many whole frames per block as fit the per-ref tile budget (divisor of BT,
    # so there is never a ragged tail).  ~2 MiB/ref keeps double-buffered inputs +
    # outputs well inside v5e's 16 MiB scoped default and v7x's 64 MiB VMEM.
    rows = _largest_divisor_leq(bt, max_block_bytes // max(frame_bytes, 1))
    num_blocks = bt // rows

    kernel = functools.partial(
        _fused_forward_kernel,
        scale=float(scale_factor) if scale_factor else None,
        do_norm=bool(norm_preprocess),
        eps=1e-12,
    )
    big_map = lambda i: (i, 0, 0)

    xnoisy, lpart = pl.pallas_call(
        kernel,
        out_shape=(
            jax.ShapeDtypeStruct((bt, c, hw), frames_bt.dtype),
            jax.ShapeDtypeStruct((num_blocks, 1, hw), jnp.float32),
        ),
        grid_spec=pltpu.PrefetchScalarGridSpec(
            num_scalar_prefetch=0,
            grid=(num_blocks,),
            in_specs=[
                pl.BlockSpec((rows, c, hw), big_map),   # frames (lane axis = HW)
                pl.BlockSpec((rows, c, hw), big_map),   # noise
                pl.BlockSpec((rows, 1, 1), big_map),    # sqrt(alphas_cumprod[t])
                pl.BlockSpec((rows, 1, 1), big_map),    # sqrt(1 - alphas_cumprod[t])
            ],
            out_specs=(
                pl.BlockSpec((rows, c, hw), big_map),   # x_noisy
                pl.BlockSpec((1, 1, hw), big_map),      # per-block loss partial
            ),
        ),
        compiler_params=pltpu.CompilerParams(
            dimension_semantics=("parallel",),          # shards across v7x's 2 TCs
            vmem_limit_bytes=32 * 1024 * 1024,
        ),
    )(frames_bt, noise_bt, a_bt, b_bt)

    loss = jnp.sum(lpart) / jnp.float32(bt * c * hw)    # loss.mean()
    return xnoisy, loss


# --------------------------------------------------------------------------
# BaseModel (Pallas/JAX version)
# --------------------------------------------------------------------------
class BaseModelPallas:
    def __init__(self, key, *, in_channels, num_frames, n_token_per_frame,
                 n_channel_per_token, skip_vae=True, noise_level="full_sequence",
                 scale_factor=0.18215, norm_preprocess=True,
                 condition_mode="uncond"):
        assert skip_vae, "VAE is an external config; only skip_vae=True supported"
        assert condition_mode.lower() == "uncond"
        self.num_frames = num_frames
        self.in_channels = in_channels
        self.scale_factor = scale_factor
        self.noise_level = noise_level
        self.n_token_per_frame = n_token_per_frame
        self.n_channel_per_token = n_channel_per_token
        self.norm_preprocess = norm_preprocess
        self.condition_mode = condition_mode
        self.timesteps = NUM_TIMESTEPS

        # nn.Parameter(torch.randn(77, 768) * 0.1) — deterministic init
        self.context_emb = jax.random.normal(key, (77, 768), jnp.float32) * 0.1

        # DDPM linear beta schedule (LatentDiffusion default: 1e-4 .. 2e-2)
        betas = jnp.linspace(1e-4, 2e-2, NUM_TIMESTEPS, dtype=jnp.float32)
        alphas_cumprod = jnp.cumprod(1.0 - betas)
        self.sqrt_ac = jnp.sqrt(alphas_cumprod).astype(jnp.float32)
        self.sqrt_om = jnp.sqrt(1.0 - alphas_cumprod).astype(jnp.float32)

    def _generate_noise_levels(self, xs, key):
        b, t = xs.shape[:2]
        if self.noise_level == "full_sequence":
            ts = jax.random.randint(key, (b,), 0, self.timesteps, jnp.int32)
            ts = jnp.broadcast_to(ts[:, None], (b, t))
        elif self.noise_level == "diff_forcing":
            ts = jax.random.randint(key, (b, t), 0, self.timesteps, jnp.int32)
        else:
            raise ValueError(f"No supported {self.noise_level}")
        return ts.astype(jnp.int32)

    def forward(self, batch, key):
        xs = batch["frames"]                                  # (B, T, C, H, W)
        b, t, c, h, w = xs.shape
        # cond (c_crossattn) / masks only feed the external UNet; built for parity.
        _cond = dict(c_crossattn=[jnp.broadcast_to(self.context_emb[None],
                                                   (b, 77, 768))])
        noise_levels = self._generate_noise_levels(xs, key)   # (B, T)
        t_flat = noise_levels.reshape(b * t)
        # Gather per-frame DDPM coefficients in the wrapper (tiny vectors, no
        # in-kernel SMEM table lookups).
        a_bt = self.sqrt_ac[t_flat].reshape(b * t, 1, 1)
        b_bt = self.sqrt_om[t_flat].reshape(b * t, 1, 1)

        # Free view: (B,T,C,H,W) -> (B*T, C, H*W) — channels on sublanes, spatial
        # tokens on lanes.  No XLA transpose is emitted; normalize-over-channels is
        # done in-kernel over axis=-2, which is numerically identical to
        # F.normalize(rearrange(zs,'b t c h w -> b t (h w) c'), dim=-1).
        zs_bt = xs.reshape(b * t, c, h * w)
        noise = jax.random.normal(jax.random.fold_in(key, 1), zs_bt.shape, zs_bt.dtype)

        _zs_pred, loss = fused_preprocess_qsample_loss(
            zs_bt, noise, a_bt, b_bt,
            scale_factor=self.scale_factor,
            norm_preprocess=self.norm_preprocess,
        )
        return {"loss": loss}


# --------------------------------------------------------------------------
# Pure-JAX reference (for a cheap in-script correctness check)
# --------------------------------------------------------------------------
def _reference(frames_bt, noise_bt, a_bt, b_bt, scale_factor, norm_preprocess):
    x = frames_bt.astype(jnp.float32)
    if scale_factor:
        x = x * scale_factor
    if norm_preprocess:
        ss = jnp.sum(x * x, axis=-2, keepdims=True)
        x = x * lax.rsqrt(jnp.maximum(ss, 1e-12 * 1e-12))
    xnoisy = a_bt * x + b_bt * noise_bt
    loss = jnp.mean(noise_bt.astype(jnp.float32) ** 2)
    return xnoisy, loss


if __name__ == "__main__":
    # Small, module-consistent shapes: batch=2, frames=8, channels=4, 16x16 spatial
    B, T, C, H, W = 2, 8, 4, 16, 16
    root = jax.random.PRNGKey(0)
    k_param, k_data, k_fwd = jax.random.split(root, 3)

    model = BaseModelPallas(
        k_param,
        in_channels=C,
        num_frames=T,
        n_token_per_frame=H * W,
        n_channel_per_token=C,
        skip_vae=True,
        noise_level="full_sequence",
        scale_factor=0.18215,
        norm_preprocess=True,
        condition_mode="uncond",
    )

    frames = jax.random.normal(k_data, (B, T, C, H, W), jnp.float32)
    out = model.forward({"frames": frames}, k_fwd)
    loss = jax.block_until_ready(out["loss"])
    assert jnp.isfinite(loss)

    # Self-check of the fused kernel against the pure-JAX reference, using a
    # small block budget so the multi-block ("parallel" grid + per-block loss
    # partials) path is exercised too.
    zs_bt = frames.reshape(B * T, C, H * W)
    noise = jax.random.normal(jax.random.PRNGKey(7), zs_bt.shape, zs_bt.dtype)
    t_chk = jax.random.randint(jax.random.PRNGKey(8), (B * T,), 0, NUM_TIMESTEPS)
    a_bt = model.sqrt_ac[t_chk].reshape(-1, 1, 1)
    b_bt = model.sqrt_om[t_chk].reshape(-1, 1, 1)
    xk, lk = fused_preprocess_qsample_loss(
        zs_bt, noise, a_bt, b_bt,
        scale_factor=0.18215, norm_preprocess=True,
        max_block_bytes=32 * 1024,            # force >1 grid block at demo sizes
    )
    xr, lr = _reference(zs_bt, noise, a_bt, b_bt, 0.18215, True)
    jax.block_until_ready((xk, lk))
    assert jnp.allclose(xk, xr, rtol=1e-3, atol=1e-3)
    assert jnp.allclose(lk, lr, rtol=1e-4, atol=1e-5)

    print("KERNEL_OK")
</pallas_src>

<mosaic_0001>
module attributes {stable_mosaic.version = 11 : i64} {
  func.func @_fused_forward_kernel(%arg0: i32, %arg1: memref<16x4x256xf32, #tpu.memory_space<vmem>>, %arg2: memref<16x4x256xf32, #tpu.memory_space<vmem>>, %arg3: memref<16x1x1xf32, #tpu.memory_space<vmem>>, %arg4: memref<16x1x1xf32, #tpu.memory_space<vmem>>, %arg5: memref<16x4x256xf32, #tpu.memory_space<vmem>>, %arg6: memref<1x1x256xf32, #tpu.memory_space<vmem>>) attributes {dimension_semantics = [#tpu.dimension_semantics<parallel>], iteration_bounds = array<i64: 1>, scalar_prefetch = 0 : i64, scratch_operands = 0 : i64, tpu.core_type = #tpu.core_type<tc>, window_params = [{transform_indices = @transform_0, window_bounds = array<i64: 16, 4, 256>}, {transform_indices = @transform_1, window_bounds = array<i64: 16, 4, 256>}, {transform_indices = @transform_2, window_bounds = array<i64: 16, 1, 1>}, {transform_indices = @transform_3, window_bounds = array<i64: 16, 1, 1>}, {transform_indices = @transform_4, window_bounds = array<i64: 16, 4, 256>}, {transform_indices = @transform_5, window_bounds = array<i64: 1, 1, 256>}]} {
    %c0 = arith.constant 0 : index
    %c0_0 = arith.constant 0 : index
    %c0_1 = arith.constant 0 : index
    %0 = vector.load %arg1[%c0, %c0_0, %c0_1] : memref<16x4x256xf32, #tpu.memory_space<vmem>>, vector<16x4x256xf32>
    %cst = arith.constant 1.821500e-01 : f32
    %1 = vector.broadcast %cst : f32 to vector<16x4x256xf32>
    %2 = arith.mulf %0, %1 : vector<16x4x256xf32>
    %3 = arith.mulf %2, %2 : vector<16x4x256xf32>
    %cst_2 = arith.constant dense<0.000000e+00> : vector<16x256xf32>
    %4 = vector.multi_reduction <add>, %3, %cst_2 [1] : vector<16x4x256xf32> to vector<16x256xf32>
    %5 = vector.shape_cast %4 : vector<16x256xf32> to vector<16x1x256xf32>
    %cst_3 = arith.constant 1.000000e-24 : f32
    %6 = vector.broadcast %cst_3 : f32 to vector<16x1x256xf32>
    %7 = arith.maximumf %5, %6 : vector<16x1x256xf32>
    %8 = math.rsqrt %7 : vector<16x1x256xf32>
    %9 = vector.broadcast %8 : vector<16x1x256xf32> to vector<16x4x256xf32>
    %10 = arith.mulf %2, %9 : vector<16x4x256xf32>
    %c0_4 = arith.constant 0 : index
    %c0_5 = arith.constant 0 : index
    %c0_6 = arith.constant 0 : index
    %11 = vector.load %arg2[%c0_4, %c0_5, %c0_6] : memref<16x4x256xf32, #tpu.memory_space<vmem>>, vector<16x4x256xf32>
    %c0_7 = arith.constant 0 : index
    %c0_8 = arith.constant 0 : index
    %c0_9 = arith.constant 0 : index
    %12 = vector.load %arg3[%c0_7, %c0_8, %c0_9] : memref<16x1x1xf32, #tpu.memory_space<vmem>>, vector<16x1x1xf32>
    %c0_10 = arith.constant 0 : index
    %c0_11 = arith.constant 0 : index
    %c0_12 = arith.constant 0 : index
    %13 = vector.load %arg4[%c0_10, %c0_11, %c0_12] : memref<16x1x1xf32, #tpu.memory_space<vmem>>, vector<16x1x1xf32>
    %14 = vector.broadcast %12 : vector<16x1x1xf32> to vector<16x4x256xf32>
    %15 = arith.mulf %14, %10 : vector<16x4x256xf32>
    %16 = vector.broadcast %13 : vector<16x1x1xf32> to vector<16x4x256xf32>
    %17 = arith.mulf %16, %11 : vector<16x4x256xf32>
    %18 = arith.addf %15, %17 : vector<16x4x256xf32>
    %c0_13 = arith.constant 0 : index
    %c0_14 = arith.constant 0 : index
    %c0_15 = arith.constant 0 : index
    %19 = vector.load %arg5[%c0_13, %c0_14, %c0_15] : memref<16x4x256xf32, #tpu.memory_space<vmem>>, vector<16x4x256xf32>
    tpu.vector_store %arg5[%c0_13, %c0_14, %c0_15], %18 {strides = array<i32>} : memref<16x4x256xf32, #tpu.memory_space<vmem>>, vector<16x4x256xf32>,
    %20 = arith.mulf %11, %11 : vector<16x4x256xf32>
    %cst_16 = arith.constant dense<0.000000e+00> : vector<256xf32>
    %21 = vector.multi_reduction <add>, %20, %cst_16 [0, 1] : vector<16x4x256xf32> to vector<256xf32>
    %22 = vector.shape_cast %21 : vector<256xf32> to vector<1x1x256xf32>
    %c0_17 = arith.constant 0 : index
    %c0_18 = arith.constant 0 : index
    %c0_19 = arith.constant 0 : index
    %23 = vector.load %arg6[%c0_17, %c0_18, %c0_19] : memref<1x1x256xf32, #tpu.memory_space<vmem>>, vector<1x1x256xf32>
    tpu.vector_store %arg6[%c0_17, %c0_18, %c0_19], %22 {strides = array<i32>} : memref<1x1x256xf32, #tpu.memory_space<vmem>>, vector<1x1x256xf32>,
    return
  }
  func.func @transform_0(%arg0: i32) -> (i32, i32, i32) {
    %c0_i32 = arith.constant 0 : i32
    %c0_i32_0 = arith.constant 0 : i32
    %c0_i32_1 = arith.constant 0 : i32
    return %arg0, %c0_i32, %c0_i32_0 : i32, i32, i32
  }
  func.func @transform_1(%arg0: i32) -> (i32, i32, i32) {
    %c0_i32 = arith.constant 0 : i32
    %c0_i32_0 = arith.constant 0 : i32
    %c0_i32_1 = arith.constant 0 : i32
    return %arg0, %c0_i32, %c0_i32_0 : i32, i32, i32
  }
  func.func @transform_2(%arg0: i32) -> (i32, i32, i32) {
    %c0_i32 = arith.constant 0 : i32
    %c0_i32_0 = arith.constant 0 : i32
    %c0_i32_1 = arith.constant 0 : i32
    return %arg0, %c0_i32, %c0_i32_0 : i32, i32, i32
  }
  func.func @transform_3(%arg0: i32) -> (i32, i32, i32) {
    %c0_i32 = arith.constant 0 : i32
    %c0_i32_0 = arith.constant 0 : i32
    %c0_i32_1 = arith.constant 0 : i32
    return %arg0, %c0_i32, %c0_i32_0 : i32, i32, i32
  }
  func.func @transform_4(%arg0: i32) -> (i32, i32, i32) {
    %c0_i32 = arith.constant 0 : i32
    %c0_i32_0 = arith.constant 0 : i32
    %c0_i32_1 = arith.constant 0 : i32
    return %arg0, %c0_i32, %c0_i32_0 : i32, i32, i32
  }
  func.func @transform_5(%arg0: i32) -> (i32, i32, i32) {
    %c0_i32 = arith.constant 0 : i32
    %c0_i32_0 = arith.constant 0 : i32
    %c0_i32_1 = arith.constant 0 : i32
    return %arg0, %c0_i32, %c0_i32_0 : i32, i32, i32
  }
}

</mosaic_0001>

<llo_original>
// kernel: tpu_custom_call.1
$region0: #{tpu_custom_call.1}
  #allocation0 [shape = 'u32[]', space=smem, size = 0x4, offset = 0x4, fixed_abs, tag = 'smem constant byte address 0x4 - core index']
  #allocation1 [shape = 'u32[144,128]{1,0:T(1,128)}', space=vmem, size = 0x12000, scoped, tag = 'internal scratch']
  %s0 = inlined_call_operand.hbm [shape: f32[16,4,256], index: 0, kind: input, shape index: {}]
  %s1 = inlined_call_operand.hbm [shape: f32[16,4,256], index: 1, kind: input, shape index: {}]
  %s2 = inlined_call_operand.vmem [shape: f32[16,1,1], index: 2, kind: input, shape index: {}]
  %s3 = inlined_call_operand.vmem [shape: f32[16,1,1], index: 3, kind: input, shape index: {}]
  %s4 = inlined_call_operand.hbm [shape: f32[16,4,256], index: 4, kind: output, shape index: {0}]
  %s5 = inlined_call_operand.hbm [shape: f32[1,1,256], index: 5, kind: output, shape index: {1}]
  %6 = xla_tuple %s4, %s5
  %s7 = sld [smem:[#allocation0]]
  $region42: #{tpu_custom_call.1} parent=0
    _
  %s9 = ssub.s32 1, %s7
  %s10 = scalar_select 0, %s9, %s7
  $region1: #{tpu_custom_call.1} parent=0
    #allocation2 [shape = 'u8[65536]{0}', space=vmem, size = 0x10000, scoped, tag = 'input window, operand 0, single buffered']
    #allocation3 [shape = 's32[1]{0}', space=sflag, size = 0x4, scoped, tag = 'scoped memory for tpu_custom_call.1']
    #allocation4 [shape = 's32[1]{0}', space=sflag, size = 0x4, scoped, tag = 'scoped memory for tpu_custom_call.1']
    #allocation5 [shape = 'u8[65536]{0}', space=vmem, size = 0x10000, scoped, tag = 'input window, operand 1, single buffered']
    #allocation6 [shape = 's32[1]{0}', space=sflag, size = 0x4, scoped, tag = 'scoped memory for tpu_custom_call.1']
    #allocation7 [shape = 'u8[65536]{0}', space=vmem, size = 0x10000, scoped, tag = 'output window, operand 0, single buffered']
    #allocation8 [shape = 'u8[1024]{0}', space=vmem, size = 0x400, scoped, tag = 'output window, operand 1, single buffered']
    #allocation9 [shape = 's32[1]{0}', space=sflag, size = 0x4, scoped, tag = 'scoped memory for tpu_custom_call.1']
    %11 = vsyncpa [#allocation3], 0
    %12 = vsyncpa [#allocation6], 0
    %13 = vsyncpa [#allocation4], 0
    %14 = vsyncpa [#allocation9], 0
    // Predicated region
    $region2: #{tpu_custom_call.1} parent=1 // pred_check
      _
    $region3: #{tpu_custom_call.1} parent=1 // pred_check_branch
      %16 = sbr.rel (0) target = $region5
    $region4: #{tpu_custom_call.1} parent=1 // pred_region
      %s18 = ssub.s32 2048, 2048
      %19 = vsyncadd [#allocation3], %s18
      %s20 = sshll.u32 [#allocation2], 4
      %s21 = int_to_ptr.vmem [resolvable:$true] %s20
      %26 = dma.hbm_to_vmem [thread:$0]  %s0, 2048, %s21, [#allocation3], 128, 128, 8
    $region5: #{tpu_custom_call.1} parent=1 // pred_fallthru
      _
    // Predicated region
    $region6: #{tpu_custom_call.1} parent=1 // pred_check
      _
    $region7: #{tpu_custom_call.1} parent=1 // pred_check_branch
      %28 = sbr.rel (0) target = $region9
    $region8: #{tpu_custom_call.1} parent=1 // pred_region
      %s30 = ssub.s32 2048, 2048
      %31 = vsyncadd [#allocation6], %s30
      %s32 = sshll.u32 [#allocation5], 4
      %s33 = int_to_ptr.vmem [resolvable:$true] %s32
      %38 = dma.hbm_to_vmem [thread:$0]  %s1, 2048, %s33, [#allocation6], 128, 128, 8
    $region9: #{tpu_custom_call.1} parent=1 // pred_fallthru
      _
    // Predicated region
    $region10: #{tpu_custom_call.1} parent=1 // pred_check
      _
    $region11: #{tpu_custom_call.1} parent=1 // pred_check_branch
      %40 = sbr.rel (0) target = $region13
    $region12: #{tpu_custom_call.1} parent=1 // pred_region
      _
    $region13: #{tpu_custom_call.1} parent=1 // pred_fallthru
      _
    // Predicated region
    $region14: #{tpu_custom_call.1} parent=1 // pred_check
      _
    $region15: #{tpu_custom_call.1} parent=1 // pred_check_branch
      %42 = sbr.rel (0) target = $region17
    $region16: #{tpu_custom_call.1} parent=1 // pred_region
      _
    $region17: #{tpu_custom_call.1} parent=1 // pred_fallthru
      _
    // Predicated region
    $region18: #{tpu_custom_call.1} parent=1 // pred_check
      _
    $region19: #{tpu_custom_call.1} parent=1 // pred_check_branch
      %44 = sbr.rel (0) target = $region21
    $region20: #{tpu_custom_call.1} parent=1 // pred_region
      %45 = dma.done [#allocation3], 2048
    $region21: #{tpu_custom_call.1} parent=1 // pred_fallthru
      _
    // Predicated region
    $region22: #{tpu_custom_call.1} parent=1 // pred_check
      _
    $region23: #{tpu_custom_call.1} parent=1 // pred_check_branch
      %47 = sbr.rel (0) target = $region25
    $region24: #{tpu_custom_call.1} parent=1 // pred_region
      %48 = dma.done [#allocation6], 2048
    $region25: #{tpu_custom_call.1} parent=1 // pred_fallthru
      _
    %v49 = vld [vmem:[#allocation2] sm:$0xff]
    %v50 = vld [vmem:[#allocation2 + $0x8] sm:$0xff]
    %v51 = vld [vmem:[#allocation2 + $0x10] sm:$0xff]
    %v52 = vld [vmem:[#allocation2 + $0x18] sm:$0xff]
    %v53 = vld [vmem:[#allocation2 + $0x20] sm:$0xff]
    %v54 = vld [vmem:[#allocation2 + $0x28] sm:$0xff]
    %v55 = vld [vmem:[#allocation2 + $0x30] sm:$0xff]
    %v56 = vld [vmem:[#allocation2 + $0x38] sm:$0xff]
    %v57 = vld [vmem:[#allocation2 + $0x40] sm:$0xff]
    %v58 = vld [vmem:[#allocation2 + $0x48] sm:$0xff]
    %v59 = vld [vmem:[#allocation2 + $0x50] sm:$0xff]
    %v60 = vld [vmem:[#allocation2 + $0x58] sm:$0xff]
    %v61 = vld [vmem:[#allocation2 + $0x60] sm:$0xff]
    %v62 = vld [vmem:[#allocation2 + $0x68] sm:$0xff]
    %v63 = vld [vmem:[#allocation2 + $0x70] sm:$0xff]
    %v64 = vld [vmem:[#allocation2 + $0x78] sm:$0xff]
    %v65 = vmul.f32 %v49, 0.18215
    %v66 = vmul.f32 %v50, 0.18215
    %v67 = vmul.f32 %v51, 0.18215
    %v68 = vmul.f32 %v52, 0.18215
    %v69 = vmul.f32 %v53, 0.18215
    %v70 = vmul.f32 %v54, 0.18215
    %v71 = vmul.f32 %v55, 0.18215
    %v72 = vmul.f32 %v56, 0.18215
    %v73 = vmul.f32 %v57, 0.18215
    %v74 = vmul.f32 %v58, 0.18215
    %v75 = vmul.f32 %v59, 0.18215
    %v76 = vmul.f32 %v60, 0.18215
    %v77 = vmul.f32 %v61, 0.18215
    %v78 = vmul.f32 %v62, 0.18215
    %v79 = vmul.f32 %v63, 0.18215
    %v80 = vmul.f32 %v64, 0.18215
    %v81 = vmul.f32 %v65, %v65
    %v82 = vmul.f32 %v66, %v66
    %v83 = vmul.f32 %v67, %v67
    %v84 = vmul.f32 %v68, %v68
    %v85 = vmul.f32 %v69, %v69
    %v86 = vmul.f32 %v70, %v70
    %v87 = vmul.f32 %v71, %v71
    %v88 = vmul.f32 %v72, %v72
    %v89 = vmul.f32 %v73, %v73
    %v90 = vmul.f32 %v74, %v74
    %v91 = vmul.f32 %v75, %v75
    %v92 = vmul.f32 %v76, %v76
    %v93 = vmul.f32 %v77, %v77
    %v94 = vmul.f32 %v78, %v78
    %v95 = vmul.f32 %v79, %v79
    %v96 = vmul.f32 %v80, %v80
    %v113 = vcombine.high %v81, %v81
    %v114 = vcombine.high %v82, %v82
    %v115 = vcombine.high %v83, %v83
    %v116 = vcombine.high %v84, %v84
    %v117 = vcombine.high %v85, %v85
    %v118 = vcombine.high %v86, %v86
    %v119 = vcombine.high %v87, %v87
    %v120 = vcombine.high %v88, %v88
    %v121 = vcombine.high %v89, %v89
    %v122 = vcombine.high %v90, %v90
    %v123 = vcombine.high %v91, %v91
    %v124 = vcombine.high %v92, %v92
    %v125 = vcombine.high %v93, %v93
    %v126 = vcombine.high %v94, %v94
    %v127 = vcombine.high %v95, %v95
    %v128 = vcombine.high %v96, %v96
    %vm145 = vcmask 1043456
    %v146 = vsel %vm145, %v81, 0.0
    %v147 = vrot.slane %v146, 4
    %v148 = vadd.f32 %v146, %v147
    %v149 = vrot.slane %v148, 2
    %v150 = vadd.f32 %v148, %v149
    %v151 = vrot.slane %v150, 1
    %v152 = vadd.f32 %v150, %v151
    %v153 = vsel %vm145, %v113, 0.0
    %v154 = vrot.slane %v153, 4
    %v155 = vadd.f32 %v153, %v154
    %v156 = vrot.slane %v155, 2
    %v157 = vadd.f32 %v155, %v156
    %v158 = vrot.slane %v157, 1
    %v159 = vadd.f32 %v157, %v158
    %v160 = vsel %vm145, %v82, 0.0
    %v161 = vrot.slane %v160, 4
    %v162 = vadd.f32 %v160, %v161
    %v163 = vrot.slane %v162, 2
    %v164 = vadd.f32 %v162, %v163
    %v165 = vrot.slane %v164, 1
    %v166 = vadd.f32 %v164, %v165
    %v167 = vsel %vm145, %v114, 0.0
    %v168 = vrot.slane %v167, 4
    %v169 = vadd.f32 %v167, %v168
    %v170 = vrot.slane %v169, 2
    %v171 = vadd.f32 %v169, %v170
    %v172 = vrot.slane %v171, 1
    %v173 = vadd.f32 %v171, %v172
    %v174 = vsel %vm145, %v83, 0.0
    %v175 = vrot.slane %v174, 4
    %v176 = vadd.f32 %v174, %v175
    %v177 = vrot.slane %v176, 2
    %v178 = vadd.f32 %v176, %v177
    %v179 = vrot.slane %v178, 1
    %v180 = vadd.f32 %v178, %v179
    %v181 = vsel %vm145, %v115, 0.0
    %v182 = vrot.slane %v181, 4
    %v183 = vadd.f32 %v181, %v182
    %v184 = vrot.slane %v183, 2
    %v185 = vadd.f32 %v183, %v184
    %v186 = vrot.slane %v185, 1
    %v187 = vadd.f32 %v185, %v186
    %v188 = vsel %vm145, %v84, 0.0
    %v189 = vrot.slane %v188, 4
    %v190 = vadd.f32 %v188, %v189
    %v191 = vrot.slane %v190, 2
    %v192 = vadd.f32 %v190, %v191
    %v193 = vrot.slane %v192, 1
    %v194 = vadd.f32 %v192, %v193
    %v195 = vsel %vm145, %v116, 0.0
    %v196 = vrot.slane %v195, 4
    %v197 = vadd.f32 %v195, %v196
    %v198 = vrot.slane %v197, 2
    %v199 = vadd.f32 %v197, %v198
    %v200 = vrot.slane %v199, 1
    %v201 = vadd.f32 %v199, %v200
    %v202 = vsel %vm145, %v85, 0.0
    %v203 = vrot.slane %v202, 4
    %v204 = vadd.f32 %v202, %v203
    %v205 = vrot.slane %v204, 2
    %v206 = vadd.f32 %v204, %v205
    %v207 = vrot.slane %v206, 1
    %v208 = vadd.f32 %v206, %v207
    %v209 = vsel %vm145, %v117, 0.0
    %v210 = vrot.slane %v209, 4
    %v211 = vadd.f32 %v209, %v210
    %v212 = vrot.slane %v211, 2
    %v213 = vadd.f32 %v211, %v212
    %v214 = vrot.slane %v213, 1
    %v215 = vadd.f32 %v213, %v214
    %v216 = vsel %vm145, %v86, 0.0
    %v217 = vrot.slane %v216, 4
    %v218 = vadd.f32 %v216, %v217
    %v219 = vrot.slane %v218, 2
    %v220 = vadd.f32 %v218, %v219
    %v221 = vrot.slane %v220, 1
    %v222 = vadd.f32 %v220, %v221
    %v223 = vsel %vm145, %v118, 0.0
    %v224 = vrot.slane %v223, 4
    %v225 = vadd.f32 %v223, %v224
    %v226 = vrot.slane %v225, 2
    %v227 = vadd.f32 %v225, %v226
    %v228 = vrot.slane %v227, 1
    %v229 = vadd.f32 %v227, %v228
    %v230 = vsel %vm145, %v87, 0.0
    %v231 = vrot.slane %v230, 4
    %v232 = vadd.f32 %v230, %v231
    %v233 = vrot.slane %v232, 2
    %v234 = vadd.f32 %v232, %v233
    %v235 = vrot.slane %v234, 1
    %v236 = vadd.f32 %v234, %v235
    %v237 = vsel %vm145, %v119, 0.0
    %v238 = vrot.slane %v237, 4
    %v239 = vadd.f32 %v237, %v238
    %v240 = vrot.slane %v239, 2
    %v241 = vadd.f32 %v239, %v240
    %v242 = vrot.slane %v241, 1
    %v243 = vadd.f32 %v241, %v242
    %v244 = vsel %vm145, %v88, 0.0
    %v245 = vrot.slane %v244, 4
    %v246 = vadd.f32 %v244, %v245
    %v247 = vrot.slane %v246, 2
    %v248 = vadd.f32 %v246, %v247
    %v249 = vrot.slane %v248, 1
    %v250 = vadd.f32 %v248, %v249
    %v251 = vsel %vm145, %v120, 0.0
    %v252 = vrot.slane %v251, 4
    %v253 = vadd.f32 %v251, %v252
    %v254 = vrot.slane %v253, 2
    %v255 = vadd.f32 %v253, %v254
    %v256 = vrot.slane %v255, 1
    %v257 = vadd.f32 %v255, %v256
    %v258 = vsel %vm145, %v89, 0.0
    %v259 = vrot.slane %v258, 4
    %v260 = vadd.f32 %v258, %v259
    %v261 = vrot.slane %v260, 2
    %v262 = vadd.f32 %v260, %v261
    %v263 = vrot.slane %v262, 1
    %v264 = vadd.f32 %v262, %v263
    %v265 = vsel %vm145, %v121, 0.0
    %v266 = vrot.slane %v265, 4
    %v267 = vadd.f32 %v265, %v266
    %v268 = vrot.slane %v267, 2
    %v269 = vadd.f32 %v267, %v268
    %v270 = vrot.slane %v269, 1
    %v271 = vadd.f32 %v269, %v270
    %v272 = vsel %vm145, %v90, 0.0
    %v273 = vrot.slane %v272, 4
    %v274 = vadd.f32 %v272, %v273
    %v275 = vrot.slane %v274, 2
    %v276 = vadd.f32 %v274, %v275
    %v277 = vrot.slane %v276, 1
    %v278 = vadd.f32 %v276, %v277
    %v279 = vsel %vm145, %v122, 0.0
    %v280 = vrot.slane %v279, 4
    %v281 = vadd.f32 %v279, %v280
    %v282 = vrot.slane %v281, 2
    %v283 = vadd.f32 %v281, %v282
    %v284 = vrot.slane %v283, 1
    %v285 = vadd.f32 %v283, %v284
    %v286 = vsel %vm145, %v91, 0.0
    %v287 = vrot.slane %v286, 4
    %v288 = vadd.f32 %v286, %v287
    %v289 = vrot.slane %v288, 2
    %v290 = vadd.f32 %v288, %v289
    %v291 = vrot.slane %v290, 1
    %v292 = vadd.f32 %v290, %v291
    %v293 = vsel %vm145, %v123, 0.0
    %v294 = vrot.slane %v293, 4
    %v295 = vadd.f32 %v293, %v294
    %v296 = vrot.slane %v295, 2
    %v297 = vadd.f32 %v295, %v296
    %v298 = vrot.slane %v297, 1
    %v299 = vadd.f32 %v297, %v298
    %v300 = vsel %vm145, %v92, 0.0
    %v301 = vrot.slane %v300, 4
    %v302 = vadd.f32 %v300, %v301
    %v303 = vrot.slane %v302, 2
    %v304 = vadd.f32 %v302, %v303
    %v305 = vrot.slane %v304, 1
    %v306 = vadd.f32 %v304, %v305
    %v307 = vsel %vm145, %v124, 0.0
    %v308 = vrot.slane %v307, 4
    %v309 = vadd.f32 %v307, %v308
    %v310 = vrot.slane %v309, 2
    %v311 = vadd.f32 %v309, %v310
    %v312 = vrot.slane %v311, 1
    %v313 = vadd.f32 %v311, %v312
    %v314 = vsel %vm145, %v93, 0.0
    %v315 = vrot.slane %v314, 4
    %v316 = vadd.f32 %v314, %v315
    %v317 = vrot.slane %v316, 2
    %v318 = vadd.f32 %v316, %v317
    %v319 = vrot.slane %v318, 1
    %v320 = vadd.f32 %v318, %v319
    %v321 = vsel %vm145, %v125, 0.0
    %v322 = vrot.slane %v321, 4
    %v323 = vadd.f32 %v321, %v322
    %v324 = vrot.slane %v323, 2
    %v325 = vadd.f32 %v323, %v324
    %v326 = vrot.slane %v325, 1
    %v327 = vadd.f32 %v325, %v326
    %v328 = vsel %vm145, %v94, 0.0
    %v329 = vrot.slane %v328, 4
    %v330 = vadd.f32 %v328, %v329
    %v331 = vrot.slane %v330, 2
    %v332 = vadd.f32 %v330, %v331
    %v333 = vrot.slane %v332, 1
    %v334 = vadd.f32 %v332, %v333
    %v335 = vsel %vm145, %v126, 0.0
    %v336 = vrot.slane %v335, 4
    %v337 = vadd.f32 %v335, %v336
    %v338 = vrot.slane %v337, 2
    %v339 = vadd.f32 %v337, %v338
    %v340 = vrot.slane %v339, 1
    %v341 = vadd.f32 %v339, %v340
    %v342 = vsel %vm145, %v95, 0.0
    %v343 = vrot.slane %v342, 4
    %v344 = vadd.f32 %v342, %v343
    %v345 = vrot.slane %v344, 2
    %v346 = vadd.f32 %v344, %v345
    %v347 = vrot.slane %v346, 1
    %v348 = vadd.f32 %v346, %v347
    %v349 = vsel %vm145, %v127, 0.0
    %v350 = vrot.slane %v349, 4
    %v351 = vadd.f32 %v349, %v350
    %v352 = vrot.slane %v351, 2
    %v353 = vadd.f32 %v351, %v352
    %v354 = vrot.slane %v353, 1
    %v355 = vadd.f32 %v353, %v354
    %v356 = vsel %vm145, %v96, 0.0
    %v357 = vrot.slane %v356, 4
    %v358 = vadd.f32 %v356, %v357
    %v359 = vrot.slane %v358, 2
    %v360 = vadd.f32 %v358, %v359
    %v361 = vrot.slane %v360, 1
    %v362 = vadd.f32 %v360, %v361
    %v363 = vsel %vm145, %v128, 0.0
    %v364 = vrot.slane %v363, 4
    %v365 = vadd.f32 %v363, %v364
    %v366 = vrot.slane %v365, 2
    %v367 = vadd.f32 %v365, %v366
    %v368 = vrot.slane %v367, 1
    %v369 = vadd.f32 %v367, %v368
    %v370 = vmax.f32 %v152, 1e-24
    %v371 = vmax.f32 %v159, 1e-24
    %v372 = vmax.f32 %v166, 1e-24
    %v373 = vmax.f32 %v173, 1e-24
    %v374 = vmax.f32 %v180, 1e-24
    %v375 = vmax.f32 %v187, 1e-24
    %v376 = vmax.f32 %v194, 1e-24
    %v377 = vmax.f32 %v201, 1e-24
    %v378 = vmax.f32 %v208, 1e-24
    %v379 = vmax.f32 %v215, 1e-24
    %v380 = vmax.f32 %v222, 1e-24
    %v381 = vmax.f32 %v229, 1e-24
    %v382 = vmax.f32 %v236, 1e-24
    %v383 = vmax.f32 %v243, 1e-24
    %v384 = vmax.f32 %v250, 1e-24
    %v385 = vmax.f32 %v257, 1e-24
    %v386 = vmax.f32 %v264, 1e-24
    %v387 = vmax.f32 %v271, 1e-24
    %v388 = vmax.f32 %v278, 1e-24
    %v389 = vmax.f32 %v285, 1e-24
    %v390 = vmax.f32 %v292, 1e-24
    %v391 = vmax.f32 %v299, 1e-24
    %v392 = vmax.f32 %v306, 1e-24
    %v393 = vmax.f32 %v313, 1e-24
    %v394 = vmax.f32 %v320, 1e-24
    %v395 = vmax.f32 %v327, 1e-24
    %v396 = vmax.f32 %v334, 1e-24
    %v397 = vmax.f32 %v341, 1e-24
    %v398 = vmax.f32 %v348, 1e-24
    %v399 = vmax.f32 %v355, 1e-24
    %v400 = vmax.f32 %v362, 1e-24
    %v401 = vmax.f32 %v369, 1e-24
    %v402 = vrsqrt.pop %v370
    %v403 = vrsqrt.pop %v371
    %v404 = vrsqrt.pop %v372
    %v405 = vrsqrt.pop %v373
    %v406 = vrsqrt.pop %v374
    %v407 = vrsqrt.pop %v375
    %v408 = vrsqrt.pop %v376
    %v409 = vrsqrt.pop %v377
    %v410 = vrsqrt.pop %v378
    %v411 = vrsqrt.pop %v379
    %v412 = vrsqrt.pop %v380
    %v413 = vrsqrt.pop %v381
    %v414 = vrsqrt.pop %v382
    %v415 = vrsqrt.pop %v383
    %v416 = vrsqrt.pop %v384
    %v417 = vrsqrt.pop %v385
    %v418 = vrsqrt.pop %v386
    %v419 = vrsqrt.pop %v387
    %v420 = vrsqrt.pop %v388
    %v421 = vrsqrt.pop %v389
    %v422 = vrsqrt.pop %v390
    %v423 = vrsqrt.pop %v391
    %v424 = vrsqrt.pop %v392
    %v425 = vrsqrt.pop %v393
    %v426 = vrsqrt.pop %v394
    %v427 = vrsqrt.pop %v395
    %v428 = vrsqrt.pop %v396
    %v429 = vrsqrt.pop %v397
    %v430 = vrsqrt.pop %v398
    %v431 = vrsqrt.pop %v399
    %v432 = vrsqrt.pop %v400
    %v433 = vrsqrt.pop %v401
    %v466 = vcombine.low %v402, %v403
    %v467 = vcombine.low %v404, %v405
    %v468 = vcombine.low %v406, %v407
    %v469 = vcombine.low %v408, %v409
    %v470 = vcombine.low %v410, %v411
    %v471 = vcombine.low %v412, %v413
    %v472 = vcombine.low %v414, %v415
    %v473 = vcombine.low %v416, %v417
    %v474 = vcombine.low %v418, %v419
    %v475 = vcombine.low %v420, %v421
    %v476 = vcombine.low %v422, %v423
    %v477 = vcombine.low %v424, %v425
    %v478 = vcombine.low %v426, %v427
    %v479 = vcombine.low %v428, %v429
    %v480 = vcombine.low %v430, %v431
    %v481 = vcombine.low %v432, %v433
    %v498 = vmul.f32 %v65, %v466
    %v499 = vmul.f32 %v66, %v467
    %v500 = vmul.f32 %v67, %v468
    %v501 = vmul.f32 %v68, %v469
    %v502 = vmul.f32 %v69, %v470
    %v503 = vmul.f32 %v70, %v471
    %v504 = vmul.f32 %v71, %v472
    %v505 = vmul.f32 %v72, %v473
    %v506 = vmul.f32 %v73, %v474
    %v507 = vmul.f32 %v74, %v475
    %v508 = vmul.f32 %v75, %v476
    %v509 = vmul.f32 %v76, %v477
    %v510 = vmul.f32 %v77, %v478
    %v511 = vmul.f32 %v78, %v479
    %v512 = vmul.f32 %v79, %v480
    %v513 = vmul.f32 %v80, %v481
    %v514 = vld [vmem:[#allocation5] sm:$0xff]
    %v515 = vld [vmem:[#allocation5 + $0x8] sm:$0xff]
    %v516 = vld [vmem:[#allocation5 + $0x10] sm:$0xff]
    %v517 = vld [vmem:[#allocation5 + $0x18] sm:$0xff]
    %v518 = vld [vmem:[#allocation5 + $0x20] sm:$0xff]
    %v519 = vld [vmem:[#allocation5 + $0x28] sm:$0xff]
    %v520 = vld [vmem:[#allocation5 + $0x30] sm:$0xff]
    %v521 = vld [vmem:[#allocation5 + $0x38] sm:$0xff]
    %v522 = vld [vmem:[#allocation5 + $0x40] sm:$0xff]
    %v523 = vld [vmem:[#allocation5 + $0x48] sm:$0xff]
    %v524 = vld [vmem:[#allocation5 + $0x50] sm:$0xff]
    %v525 = vld [vmem:[#allocation5 + $0x58] sm:$0xff]
    %v526 = vld [vmem:[#allocation5 + $0x60] sm:$0xff]
    %v527 = vld [vmem:[#allocation5 + $0x68] sm:$0xff]
    %v528 = vld [vmem:[#allocation5 + $0x70] sm:$0xff]
    %v529 = vld [vmem:[#allocation5 + $0x78] sm:$0xff]
    %v530 = vld [vmem:[%s2] sm:$0x1]
    %v531 = vld [vmem:[%s2 + $0x1] sm:$0x1]
    %v532 = vld [vmem:[%s2 + $0x2] sm:$0x1]
    %v533 = vld [vmem:[%s2 + $0x3] sm:$0x1]
    %v534 = vld [vmem:[%s2 + $0x4] sm:$0x1]
    %v535 = vld [vmem:[%s2 + $0x5] sm:$0x1]
    %v536 = vld [vmem:[%s2 + $0x6] sm:$0x1]
    %v537 = vld [vmem:[%s2 + $0x7] sm:$0x1]
    %v538 = vld [vmem:[%s2 + $0x8] sm:$0x1]
    %v539 = vld [vmem:[%s2 + $0x9] sm:$0x1]
    %v540 = vld [vmem:[%s2 + $0xa] sm:$0x1]
    %v541 = vld [vmem:[%s2 + $0xb] sm:$0x1]
    %v542 = vld [vmem:[%s2 + $0xc] sm:$0x1]
    %v543 = vld [vmem:[%s2 + $0xd] sm:$0x1]
    %v544 = vld [vmem:[%s2 + $0xe] sm:$0x1]
    %v545 = vld [vmem:[%s2 + $0xf] sm:$0x1]
    %v546 = vld [vmem:[%s3] sm:$0x1]
    %v547 = vld [vmem:[%s3 + $0x1] sm:$0x1]
    %v548 = vld [vmem:[%s3 + $0x2] sm:$0x1]
    %v549 = vld [vmem:[%s3 + $0x3] sm:$0x1]
    %v550 = vld [vmem:[%s3 + $0x4] sm:$0x1]
    %v551 = vld [vmem:[%s3 + $0x5] sm:$0x1]
    %v552 = vld [vmem:[%s3 + $0x6] sm:$0x1]
    %v553 = vld [vmem:[%s3 + $0x7] sm:$0x1]
    %v554 = vld [vmem:[%s3 + $0x8] sm:$0x1]
    %v555 = vld [vmem:[%s3 + $0x9] sm:$0x1]
    %v556 = vld [vmem:[%s3 + $0xa] sm:$0x1]
    %v557 = vld [vmem:[%s3 + $0xb] sm:$0x1]
    %v558 = vld [vmem:[%s3 + $0xc] sm:$0x1]
    %v559 = vld [vmem:[%s3 + $0xd] sm:$0x1]
    %v560 = vld [vmem:[%s3 + $0xe] sm:$0x1]
    %v561 = vld [vmem:[%s3 + $0xf] sm:$0x1]
    %v578 = vlaneseq
    %v579 = vshrl.u32 %v578, 7
    %v580 = vsub.s32 0, %v579
    %v581 = vrot.slane %v530, %v580
    %v582 = vlaneseq
    %v583 = vshrl.u32 %v582, 7
    %v584 = vsub.s32 0, %v583
    %v585 = vrot.slane %v531, %v584
    %v586 = vlaneseq
    %v587 = vshrl.u32 %v586, 7
    %v588 = vsub.s32 0, %v587
    %v589 = vrot.slane %v532, %v588
    %v590 = vlaneseq
    %v591 = vshrl.u32 %v590, 7
    %v592 = vsub.s32 0, %v591
    %v593 = vrot.slane %v533, %v592
    %v594 = vlaneseq
    %v595 = vshrl.u32 %v594, 7
    %v596 = vsub.s32 0, %v595
    %v597 = vrot.slane %v534, %v596
    %v598 = vlaneseq
    %v599 = vshrl.u32 %v598, 7
    %v600 = vsub.s32 0, %v599
    %v601 = vrot.slane %v535, %v600
    %v602 = vlaneseq
    %v603 = vshrl.u32 %v602, 7
    %v604 = vsub.s32 0, %v603
    %v605 = vrot.slane %v536, %v604
    %v606 = vlaneseq
    %v607 = vshrl.u32 %v606, 7
    %v608 = vsub.s32 0, %v607
    %v609 = vrot.slane %v537, %v608
    %v610 = vlaneseq
    %v611 = vshrl.u32 %v610, 7
    %v612 = vsub.s32 0, %v611
    %v613 = vrot.slane %v538, %v612
    %v614 = vlaneseq
    %v615 = vshrl.u32 %v614, 7
    %v616 = vsub.s32 0, %v615
    %v617 = vrot.slane %v539, %v616
    %v618 = vlaneseq
    %v619 = vshrl.u32 %v618, 7
    %v620 = vsub.s32 0, %v619
    %v621 = vrot.slane %v540, %v620
    %v622 = vlaneseq
    %v623 = vshrl.u32 %v622, 7
    %v624 = vsub.s32 0, %v623
    %v625 = vrot.slane %v541, %v624
    %v626 = vlaneseq
    %v627 = vshrl.u32 %v626, 7
    %v628 = vsub.s32 0, %v627
    %v629 = vrot.slane %v542, %v628
    %v630 = vlaneseq
    %v631 = vshrl.u32 %v630, 7
    %v632 = vsub.s32 0, %v631
    %v633 = vrot.slane %v543, %v632
    %v634 = vlaneseq
    %v635 = vshrl.u32 %v634, 7
    %v636 = vsub.s32 0, %v635
    %v637 = vrot.slane %v544, %v636
    %v638 = vlaneseq
    %v639 = vshrl.u32 %v638, 7
    %v640 = vsub.s32 0, %v639
    %v641 = vrot.slane %v545, %v640
    %642 = vset.pattern.permute.xlu0 0
    %643 = vperm.xlu0 %642, %v581
    %v644 = vpop.permute.xlu0 %643
    %646 = vset.pattern.permute.xlu0 0
    %647 = vperm.xlu0 %646, %v585
    %v648 = vpop.permute.xlu0 %647
    %650 = vset.pattern.permute.xlu0 0
    %651 = vperm.xlu0 %650, %v589
    %v652 = vpop.permute.xlu0 %651
    %654 = vset.pattern.permute.xlu0 0
    %655 = vperm.xlu0 %654, %v593
    %v656 = vpop.permute.xlu0 %655
    %658 = vset.pattern.permute.xlu0 0
    %659 = vperm.xlu0 %658, %v597
    %v660 = vpop.permute.xlu0 %659
    %662 = vset.pattern.permute.xlu0 0
    %663 = vperm.xlu0 %662, %v601
    %v664 = vpop.permute.xlu0 %663
    %666 = vset.pattern.permute.xlu0 0
    %667 = vperm.xlu0 %666, %v605
    %v668 = vpop.permute.xlu0 %667
    %670 = vset.pattern.permute.xlu0 0
    %671 = vperm.xlu0 %670, %v609
    %v672 = vpop.permute.xlu0 %671
    %674 = vset.pattern.permute.xlu0 0
    %675 = vperm.xlu0 %674, %v613
    %v676 = vpop.permute.xlu0 %675
    %678 = vset.pattern.permute.xlu0 0
    %679 = vperm.xlu0 %678, %v617
    %v680 = vpop.permute.xlu0 %679
    %682 = vset.pattern.permute.xlu0 0
    %683 = vperm.xlu0 %682, %v621
    %v684 = vpop.permute.xlu0 %683
    %686 = vset.pattern.permute.xlu0 0
    %687 = vperm.xlu0 %686, %v625
    %v688 = vpop.permute.xlu0 %687
    %690 = vset.pattern.permute.xlu0 0
    %691 = vperm.xlu0 %690, %v629
    %v692 = vpop.permute.xlu0 %691
    %694 = vset.pattern.permute.xlu0 0
    %695 = vperm.xlu0 %694, %v633
    %v696 = vpop.permute.xlu0 %695
    %698 = vset.pattern.permute.xlu0 0
    %699 = vperm.xlu0 %698, %v637
    %v700 = vpop.permute.xlu0 %699
    %702 = vset.pattern.permute.xlu0 0
    %703 = vperm.xlu0 %702, %v641
    %v704 = vpop.permute.xlu0 %703
    %v706 = vmul.f32 %v644, %v498
    %v707 = vmul.f32 %v648, %v499
    %v708 = vmul.f32 %v652, %v500
    %v709 = vmul.f32 %v656, %v501
    %v710 = vmul.f32 %v660, %v502
    %v711 = vmul.f32 %v664, %v503
    %v712 = vmul.f32 %v668, %v504
    %v713 = vmul.f32 %v672, %v505
    %v714 = vmul.f32 %v676, %v506
    %v715 = vmul.f32 %v680, %v507
    %v716 = vmul.f32 %v684, %v508
    %v717 = vmul.f32 %v688, %v509
    %v718 = vmul.f32 %v692, %v510
    %v719 = vmul.f32 %v696, %v511
    %v720 = vmul.f32 %v700, %v512
    %v721 = vmul.f32 %v704, %v513
    %v738 = vlaneseq
    %v739 = vshrl.u32 %v738, 7
    %v740 = vsub.s32 0, %v739
    %v741 = vrot.slane %v546, %v740
    %v742 = vlaneseq
    %v743 = vshrl.u32 %v742, 7
    %v744 = vsub.s32 0, %v743
    %v745 = vrot.slane %v547, %v744
    %v746 = vlaneseq
    %v747 = vshrl.u32 %v746, 7
    %v748 = vsub.s32 0, %v747
    %v749 = vrot.slane %v548, %v748
    %v750 = vlaneseq
    %v751 = vshrl.u32 %v750, 7
    %v752 = vsub.s32 0, %v751
    %v753 = vrot.slane %v549, %v752
    %v754 = vlaneseq
    %v755 = vshrl.u32 %v754, 7
    %v756 = vsub.s32 0, %v755
    %v757 = vrot.slane %v550, %v756
    %v758 = vlaneseq
    %v759 = vshrl.u32 %v758, 7
    %v760 = vsub.s32 0, %v759
    %v761 = vrot.slane %v551, %v760
    %v762 = vlaneseq
    %v763 = vshrl.u32 %v762, 7
    %v764 = vsub.s32 0, %v763
    %v765 = vrot.slane %v552, %v764
    %v766 = vlaneseq
    %v767 = vshrl.u32 %v766, 7
    %v768 = vsub.s32 0, %v767
    %v769 = vrot.slane %v553, %v768
    %v770 = vlaneseq
    %v771 = vshrl.u32 %v770, 7
    %v772 = vsub.s32 0, %v771
    %v773 = vrot.slane %v554, %v772
    %v774 = vlaneseq
    %v775 = vshrl.u32 %v774, 7
    %v776 = vsub.s32 0, %v775
    %v777 = vrot.slane %v555, %v776
    %v778 = vlaneseq
    %v779 = vshrl.u32 %v778, 7
    %v780 = vsub.s32 0, %v779
    %v781 = vrot.slane %v556, %v780
    %v782 = vlaneseq
    %v783 = vshrl.u32 %v782, 7
    %v784 = vsub.s32 0, %v783
    %v785 = vrot.slane %v557, %v784
    %v786 = vlaneseq
    %v787 = vshrl.u32 %v786, 7
    %v788 = vsub.s32 0, %v787
    %v789 = vrot.slane %v558, %v788
    %v790 = vlaneseq
    %v791 = vshrl.u32 %v790, 7
    %v792 = vsub.s32 0, %v791
    %v793 = vrot.slane %v559, %v792
    %v794 = vlaneseq
    %v795 = vshrl.u32 %v794, 7
    %v796 = vsub.s32 0, %v795
    %v797 = vrot.slane %v560, %v796
    %v798 = vlaneseq
    %v799 = vshrl.u32 %v798, 7
    %v800 = vsub.s32 0, %v799
    %v801 = vrot.slane %v561, %v800
    %802 = vset.pattern.permute.xlu0 0
    %803 = vperm.xlu0 %802, %v741
    %v804 = vpop.permute.xlu0 %803
    %806 = vset.pattern.permute.xlu0 0
    %807 = vperm.xlu0 %806, %v745
    %v808 = vpop.permute.xlu0 %807
    %810 = vset.pattern.permute.xlu0 0
    %811 = vperm.xlu0 %810, %v749
    %v812 = vpop.permute.xlu0 %811
    %814 = vset.pattern.permute.xlu0 0
    %815 = vperm.xlu0 %814, %v753
    %v816 = vpop.permute.xlu0 %815
    %818 = vset.pattern.permute.xlu0 0
    %819 = vperm.xlu0 %818, %v757
    %v820 = vpop.permute.xlu0 %819
    %822 = vset.pattern.permute.xlu0 0
    %823 = vperm.xlu0 %822, %v761
    %v824 = vpop.permute.xlu0 %823
    %826 = vset.pattern.permute.xlu0 0
    %827 = vperm.xlu0 %826, %v765
    %v828 = vpop.permute.xlu0 %827
    %830 = vset.pattern.permute.xlu0 0
    %831 = vperm.xlu0 %830, %v769
    %v832 = vpop.permute.xlu0 %831
    %834 = vset.pattern.permute.xlu0 0
    %835 = vperm.xlu0 %834, %v773
    %v836 = vpop.permute.xlu0 %835
    %838 = vset.pattern.permute.xlu0 0
    %839 = vperm.xlu0 %838, %v777
    %v840 = vpop.permute.xlu0 %839
    %842 = vset.pattern.permute.xlu0 0
    %843 = vperm.xlu0 %842, %v781
    %v844 = vpop.permute.xlu0 %843
    %846 = vset.pattern.permute.xlu0 0
    %847 = vperm.xlu0 %846, %v785
    %v848 = vpop.permute.xlu0 %847
    %850 = vset.pattern.permute.xlu0 0
    %851 = vperm.xlu0 %850, %v789
    %v852 = vpop.permute.xlu0 %851
    %854 = vset.pattern.permute.xlu0 0
    %855 = vperm.xlu0 %854, %v793
    %v856 = vpop.permute.xlu0 %855
    %858 = vset.pattern.permute.xlu0 0
    %859 = vperm.xlu0 %858, %v797
    %v860 = vpop.permute.xlu0 %859
    %862 = vset.pattern.permute.xlu0 0
    %863 = vperm.xlu0 %862, %v801
    %v864 = vpop.permute.xlu0 %863
    %v866 = vmul.f32 %v804, %v514
    %v867 = vmul.f32 %v808, %v515
    %v868 = vmul.f32 %v812, %v516
    %v869 = vmul.f32 %v816, %v517
    %v870 = vmul.f32 %v820, %v518
    %v871 = vmul.f32 %v824, %v519
    %v872 = vmul.f32 %v828, %v520
    %v873 = vmul.f32 %v832, %v521
    %v874 = vmul.f32 %v836, %v522
    %v875 = vmul.f32 %v840, %v523
    %v876 = vmul.f32 %v844, %v524
    %v877 = vmul.f32 %v848, %v525
    %v878 = vmul.f32 %v852, %v526
    %v879 = vmul.f32 %v856, %v527
    %v880 = vmul.f32 %v860, %v528
    %v881 = vmul.f32 %v864, %v529
    %v882 = vadd.f32 %v706, %v866
    %v883 = vadd.f32 %v707, %v867
    %v884 = vadd.f32 %v708, %v868
    %v885 = vadd.f32 %v709, %v869
    %v886 = vadd.f32 %v710, %v870
    %v887 = vadd.f32 %v711, %v871
    %v888 = vadd.f32 %v712, %v872
    %v889 = vadd.f32 %v713, %v873
    %v890 = vadd.f32 %v714, %v874
    %v891 = vadd.f32 %v715, %v875
    %v892 = vadd.f32 %v716, %v876
    %v893 = vadd.f32 %v717, %v877
    %v894 = vadd.f32 %v718, %v878
    %v895 = vadd.f32 %v719, %v879
    %v896 = vadd.f32 %v720, %v880
    %v897 = vadd.f32 %v721, %v881
    %898 = vst [vmem:[#allocation7] sm:$0xff] %v882
    %899 = vst [vmem:[#allocation7 + $0x8] sm:$0xff] %v883
    %900 = vst [vmem:[#allocation7 + $0x10] sm:$0xff] %v884
    %901 = vst [vmem:[#allocation7 + $0x18] sm:$0xff] %v885
    %902 = vst [vmem:[#allocation7 + $0x20] sm:$0xff] %v886
    %903 = vst [vmem:[#allocation7 + $0x28] sm:$0xff] %v887
    %904 = vst [vmem:[#allocation7 + $0x30] sm:$0xff] %v888
    %905 = vst [vmem:[#allocation7 + $0x38] sm:$0xff] %v889
    %906 = vst [vmem:[#allocation7 + $0x40] sm:$0xff] %v890
    %907 = vst [vmem:[#allocation7 + $0x48] sm:$0xff] %v891
    %908 = vst [vmem:[#allocation7 + $0x50] sm:$0xff] %v892
    %909 = vst [vmem:[#allocation7 + $0x58] sm:$0xff] %v893
    %910 = vst [vmem:[#allocation7 + $0x60] sm:$0xff] %v894
    %911 = vst [vmem:[#allocation7 + $0x68] sm:$0xff] %v895
    %912 = vst [vmem:[#allocation7 + $0x70] sm:$0xff] %v896
    %913 = vst [vmem:[#allocation7 + $0x78] sm:$0xff] %v897
    %v914 = vmul.f32 %v514, %v514
    %v915 = vmul.f32 %v515, %v515
    %v916 = vmul.f32 %v516, %v516
    %v917 = vmul.f32 %v517, %v517
    %v918 = vmul.f32 %v518, %v518
    %v919 = vmul.f32 %v519, %v519
    %v920 = vmul.f32 %v520, %v520
    %v921 = vmul.f32 %v521, %v521
    %v922 = vmul.f32 %v522, %v522
    %v923 = vmul.f32 %v523, %v523
    %v924 = vmul.f32 %v524, %v524
    %v925 = vmul.f32 %v525, %v525
    %v926 = vmul.f32 %v526, %v526
    %v927 = vmul.f32 %v527, %v527
    %v928 = vmul.f32 %v528, %v528
    %v929 = vmul.f32 %v529, %v529
    %v946 = vcombine.high %v914, %v914
    %v947 = vcombine.high %v915, %v915
    %v948 = vcombine.high %v916, %v916
    %v949 = vcombine.high %v917, %v917
    %v950 = vcombine.high %v918, %v918
    %v951 = vcombine.high %v919, %v919
    %v952 = vcombine.high %v920, %v920
    %v953 = vcombine.high %v921, %v921
    %v954 = vcombine.high %v922, %v922
    %v955 = vcombine.high %v923, %v923
    %v956 = vcombine.high %v924, %v924
    %v957 = vcombine.high %v925, %v925
    %v958 = vcombine.high %v926, %v926
    %v959 = vcombine.high %v927, %v927
    %v960 = vcombine.high %v928, %v928
    %v961 = vcombine.high %v929, %v929
    %v978 = vsel %vm145, %v914, 0.0
    %v979 = vsel %vm145, %v915, 0.0
    %v980 = vadd.f32 %v978, %v979
    %v981 = vsel %vm145, %v916, 0.0
    %v982 = vadd.f32 %v980, %v981
    %v983 = vsel %vm145, %v917, 0.0
    %v984 = vadd.f32 %v982, %v983
    %v985 = vsel %vm145, %v918, 0.0
    %v986 = vadd.f32 %v984, %v985
    %v987 = vsel %vm145, %v919, 0.0
    %v988 = vadd.f32 %v986, %v987
    %v989 = vsel %vm145, %v920, 0.0
    %v990 = vadd.f32 %v988, %v989
    %v991 = vsel %vm145, %v921, 0.0
    %v992 = vadd.f32 %v990, %v991
    %v993 = vsel %vm145, %v922, 0.0
    %v994 = vadd.f32 %v992, %v993
    %v995 = vsel %vm145, %v923, 0.0
    %v996 = vadd.f32 %v994, %v995
    %v997 = vsel %vm145, %v924, 0.0
    %v998 = vadd.f32 %v996, %v997
    %v999 = vsel %vm145, %v925, 0.0
    %v1000 = vadd.f32 %v998, %v999
    %v1001 = vsel %vm145, %v926, 0.0
    %v1002 = vadd.f32 %v1000, %v1001
    %v1003 = vsel %vm145, %v927, 0.0
    %v1004 = vadd.f32 %v1002, %v1003
    %v1005 = vsel %vm145, %v928, 0.0
    %v1006 = vadd.f32 %v1004, %v1005
    %v1007 = vsel %vm145, %v929, 0.0
    %v1008 = vadd.f32 %v1006, %v1007
    %v1009 = vrot.slane %v1008, 4
    %v1010 = vadd.f32 %v1008, %v1009
    %v1011 = vrot.slane %v1010, 2
    %v1012 = vadd.f32 %v1010, %v1011
    %v1013 = vrot.slane %v1012, 1
    %v1014 = vadd.f32 %v1012, %v1013
    %v1015 = vsel %vm145, %v946, 0.0
    %v1016 = vsel %vm145, %v947, 0.0
    %v1017 = vadd.f32 %v1015, %v1016
    %v1018 = vsel %vm145, %v948, 0.0
    %v1019 = vadd.f32 %v1017, %v1018
    %v1020 = vsel %vm145, %v949, 0.0
    %v1021 = vadd.f32 %v1019, %v1020
    %v1022 = vsel %vm145, %v950, 0.0
    %v1023 = vadd.f32 %v1021, %v1022
    %v1024 = vsel %vm145, %v951, 0.0
    %v1025 = vadd.f32 %v1023, %v1024
    %v1026 = vsel %vm145, %v952, 0.0
    %v1027 = vadd.f32 %v1025, %v1026
    %v1028 = vsel %vm145, %v953, 0.0
    %v1029 = vadd.f32 %v1027, %v1028
    %v1030 = vsel %vm145, %v954, 0.0
    %v1031 = vadd.f32 %v1029, %v1030
    %v1032 = vsel %vm145, %v955, 0.0
    %v1033 = vadd.f32 %v1031, %v1032
    %v1034 = vsel %vm145, %v956, 0.0
    %v1035 = vadd.f32 %v1033, %v1034
    %v1036 = vsel %vm145, %v957, 0.0
    %v1037 = vadd.f32 %v1035, %v1036
    %v1038 = vsel %vm145, %v958, 0.0
    %v1039 = vadd.f32 %v1037, %v1038
    %v1040 = vsel %vm145, %v959, 0.0
    %v1041 = vadd.f32 %v1039, %v1040
    %v1042 = vsel %vm145, %v960, 0.0
    %v1043 = vadd.f32 %v1041, %v1042
    %v1044 = vsel %vm145, %v961, 0.0
    %v1045 = vadd.f32 %v1043, %v1044
    %v1046 = vrot.slane %v1045, 4
    %v1047 = vadd.f32 %v1045, %v1046
    %v1048 = vrot.slane %v1047, 2
    %v1049 = vadd.f32 %v1047, %v1048
    %v1050 = vrot.slane %v1049, 1
    %v1051 = vadd.f32 %v1049, %v1050
    %v1054 = vcombine.low %v1014, %v1051
    %v1056 = vunpack.c.l.s4 1966171168
    %v1057 = vunpack.c.0.s8 %v1056
    %v1058 = vlaneseq
    %v1059 = vshrl.u32 %v1058, 7
    %v1060 = vsub.s32 %v1057, %v1059
    %v1061 = vrot.slane %v1054, %v1060
    %v1063 = vunpack.c.l.s4 1966171168
    %v1064 = vunpack.c.0.s8 %v1063
    %v1065 = vlaneseq
    %v1066 = vshrl.u32 %v1065, 7
    %v1067 = vsub.s32 %v1064, %v1066
    %v1068 = vrot.slane %v1061, %v1067
    %v1070 = vlaneseq
    %vm1071 = vcmp.ge.s32.totalorder %v1070, 0
    %vm1072 = vcmp.lt.s32.totalorder %v1070, 256
    %vm1073 = vmand %vm1071, %vm1072
    %1074 = vst.msk [vmem:[#allocation8] sm:$0x3] %vm1073, %v1068
    // Predicated region
    $region26: #{tpu_custom_call.1} parent=1 // pred_check
      _
    $region27: #{tpu_custom_call.1} parent=1 // pred_check_branch
      %1076 = sbr.rel (0) target = $region29
    $region28: #{tpu_custom_call.1} parent=1 // pred_region
      %s1078 = ssub.s32 2048, 2048
      %1079 = vsyncadd [#allocation4], %s1078
      %s1080 = sshll.u32 [#allocation7], 4
      %s1081 = int_to_ptr.vmem [resolvable:$true] %s1080
      %1086 = dma.vmem_to_hbm [thread:$0]  %s1081, 2048, %s4, [#allocation4], 128, 128, 8
    $region29: #{tpu_custom_call.1} parent=1 // pred_fallthru
      _
    // Predicated region
    $region30: #{tpu_custom_call.1} parent=1 // pred_check
      _
    $region31: #{tpu_custom_call.1} parent=1 // pred_check_branch
      %1088 = sbr.rel (0) target = $region33
    $region32: #{tpu_custom_call.1} parent=1 // pred_region
      %s1090 = ssub.s32 32, 32
      %1091 = vsyncadd [#allocation9], %s1090
      %s1093 = sshll.u32 [#allocation8], 4
      %s1094 = int_to_ptr.vmem [resolvable:$true] %s1093
      %1096 = dma.vmem_to_hbm [thread:$0]  %s1094, 32, %s5, [#allocation9]
    $region33: #{tpu_custom_call.1} parent=1 // pred_fallthru
      _
    // Predicated region
    $region34: #{tpu_custom_call.1} parent=1 // pred_check
      _
    $region35: #{tpu_custom_call.1} parent=1 // pred_check_branch
      %1098 = sbr.rel (0) target = $region37
    $region36: #{tpu_custom_call.1} parent=1 // pred_region
      %1099 = dma.done [#allocation4], 2048
    $region37: #{tpu_custom_call.1} parent=1 // pred_fallthru
      _
    // Predicated region
    $region38: #{tpu_custom_call.1} parent=1 // pred_check
      _
    $region39: #{tpu_custom_call.1} parent=1 // pred_check_branch
      %1101 = sbr.rel (0) target = $region41
    $region40: #{tpu_custom_call.1} parent=1 // pred_region
      %1102 = dma.done [#allocation9], 32
    $region41: #{tpu_custom_call.1} parent=1 // pred_fallthru
      _
    %1103 = vsyncpa [#allocation3], 1
    %1104 = vsyncpa [#allocation6], 1
    %1105 = vsyncpa [#allocation4], 1
    %1106 = vsyncpa [#allocation9], 1

</llo_original>
